<compile_context>
chip_gen: v7x
topology: tpu7x:2x2x1
jax: 0.10.0
libtpu: 0.0.40
codegen_flags: <defaults>
</compile_context>

<pallas_src>
import functools

import jax
import jax.numpy as jnp
import numpy as np
from jax.experimental import pallas as pl
from jax.experimental.pallas import tpu as pltpu

_MIB = 1024 * 1024


# ----------------------------- kernel bodies ------------------------------ #

def _sdpa_compute(q_ref, k_ref, v_ref, mask_ref, prob_ref, attn_ref, scale):
    # Blocks (VMEM): q [T,TQ,dk], k [T,Lk,dk], v [T,Lk,dv] in the caller's
    # dtype (cast to bf16 here, right before the MXU), mask [T|1,TQ,Lk] int8.
    q = q_ref[...].astype(jnp.bfloat16)
    k = k_ref[...].astype(jnp.bfloat16)
    v = v_ref[...].astype(jnp.bfloat16)

    # scores = Q @ K^T — contract last dims of both operands so Mosaic feeds
    # the MXU directly with no materialized K transpose. f32 accumulation.
    scores = jax.lax.dot_general(
        q, k,
        dimension_numbers=(((2,), (2,)), ((0,), (0,))),
        preferred_element_type=jnp.float32)                  # [T, TQ, Lk] f32
    # 1/sqrt(d_k) applied in f32 (PyTorch order); VPU work hidden under the
    # HBM-bound regime.
    scores = scores * scale

    if mask_ref is not None:
        m = mask_ref[...] != 0                               # int8 -> bool
        if m.shape[0] != scores.shape[0]:                    # shared mask blk
            m = jnp.broadcast_to(m, scores.shape)
        # Large finite negative instead of -inf: masked entries underflow to
        # exactly 0 after exp; fully-masked rows give a uniform row instead of
        # the NaNs PyTorch's masked_fill(-inf)+softmax would produce.
        scores = jnp.where(m, jnp.float32(-1e30), scores)

    # Numerically stable softmax over the key axis, in f32.
    mx = jnp.max(scores, axis=-1, keepdims=True)
    e = jnp.exp(scores - mx)
    denom = jnp.sum(e, axis=-1, keepdims=True)
    attn = e * pl.reciprocal(denom)                          # exact reciprocal

    # prob = attn @ V (bf16 MXU operands, f32 accumulate).
    prob = jax.lax.dot_general(
        attn.astype(jnp.bfloat16), v,
        dimension_numbers=(((2,), (1,)), ((0,), (0,))),
        preferred_element_type=jnp.float32)                  # [T, TQ, dv] f32

    attn_ref[...] = attn.astype(attn_ref.dtype)
    prob_ref[...] = prob.astype(prob_ref.dtype)


def _sdpa_kernel_nomask(q_ref, k_ref, v_ref, prob_ref, attn_ref, *, scale):
    _sdpa_compute(q_ref, k_ref, v_ref, None, prob_ref, attn_ref, scale)


def _sdpa_kernel_masked(q_ref, k_ref, v_ref, mask_ref, prob_ref, attn_ref, *,
                        scale):
    _sdpa_compute(q_ref, k_ref, v_ref, mask_ref, prob_ref, attn_ref, scale)


# -------------------------- tiling / VMEM sizing --------------------------- #

def _vmem_capacity_bytes():
    try:
        return int(pltpu.get_tpu_info().vmem_capacity_bytes)
    except Exception:
        return 64 * _MIB                      # conservative (v7x-sized) default


def _vmem_limits():
    cap = _vmem_capacity_bytes()
    if cap >= 128 * _MIB:                     # v5e / v6e: 128 MiB physical
        limit = 96 * _MIB
    else:                                     # v7x: 64 MiB physical per TC
        limit = max(min(int(cap * 0.625), 96 * _MIB), 16 * _MIB)
    budget = int(limit * 0.8)                 # per-step set incl. 2x buffering
    return limit, budget


def _pick_tiles(BH, Lq, Lk, dk, dv, qkv_bytes, attn_bytes, mask_mode, budget):
    """Jointly pick (bh_tile, tq): maximize per-step work under `budget`
    (double-buffering counted explicitly), prefer >= 2 grid steps (megacore),
    cap tq at 256 (v5e MXU / v7x VMEM guidance), tie-break toward larger
    bh_tile (better amortization axis)."""
    q_cands = [t for t in (256, 128, 64, 32, 16, 8) if t <= Lq and Lq % t == 0]
    if not q_cands:
        q_cands = [Lq]
    bh_cands = [t for t in range(BH, 0, -1) if BH % t == 0]

    def step_bytes(bh, tq):
        b = 2 * bh * tq * dk * qkv_bytes          # Q block (double-buffered)
        b += 2 * bh * Lk * dk * qkv_bytes         # K block
        b += 2 * bh * Lk * dv * qkv_bytes         # V block
        if mask_mode == "full":
            b += 2 * bh * tq * Lk                 # int8 mask block
        elif mask_mode == "shared":
            b += 2 * tq * Lk
        b += 2 * bh * tq * dv * 4                 # prob output block (f32)
        b += 2 * bh * tq * Lk * attn_bytes        # attn output block
        b += 2 * bh * tq * Lk * 4                 # f32 scores/exp temporaries
        return b

    best = None
    for min_steps in (2, 1):                      # prefer >= 2 grid steps
        for tq in q_cands:
            for bh in bh_cands:
                if (BH // bh) * (Lq // tq) < min_steps:
                    continue
                if step_bytes(bh, tq) > budget:
                    continue
                score = (bh * tq, bh)
                if best is None or score > best[0]:
                    best = (score, bh, tq)
        if best is not None:
            return best[1], best[2]
    return 1, q_cands[-1]                         # nothing fits: smallest tiles


# --------------------------------- wrapper --------------------------------- #

def scaled_dot_product_attention(Q, K, V, attn_mask=None, d_k=None,
                                 attn_dtype=jnp.bfloat16):
    """Pallas-TPU scaled dot-product attention.

    Q:[B,H,Lq,dk] K:[B,H,Lk,dk] V:[B,H,Lk,dv]
    attn_mask: None, [B,H,Lq,Lk], broadcastable [1,1,Lq,Lk] or [Lq,Lk]
               (True / nonzero = masked out).
    attn_dtype defaults to bfloat16 (halves the dominant attn HBM stream);
    pass jnp.float32 for a PyTorch-dtype-matching attention output.
    """
    B, H, Lq, dk = Q.shape
    Lk = K.shape[2]
    dv = V.shape[3]
    if d_k is None:
        d_k = dk
    scale = 1.0 / float(np.sqrt(d_k))
    BH = B * H

    # Keep Q/K/V in their original dtype (no wrapper-side cast pass); kernel
    # casts to bf16 just before the MXU dots.
    q = Q.reshape(BH, Lq, dk)
    k = K.reshape(BH, Lk, dk)
    v = V.reshape(BH, Lk, dv)
    qkv_bytes = q.dtype.itemsize
    attn_bytes = jnp.dtype(attn_dtype).itemsize
    prob_dtype = jnp.float32

    # Mask as 1-byte int8 (or skipped entirely when None).
    if attn_mask is None:
        mask = None
        mask_mode = None
    else:
        am = jnp.asarray(attn_mask)
        if am.ndim == 2:
            am = am[None, None]
        if am.shape[0] == 1 and am.shape[1] == 1:
            mask_mode = "shared"                      # one mask, all (b, h)
            mask = (am.reshape(1, Lq, Lk) != 0).astype(jnp.int8)
        else:
            mask_mode = "full"
            am = jnp.broadcast_to(am, (B, H, Lq, Lk))
            mask = (am != 0).astype(jnp.int8).reshape(BH, Lq, Lk)

    vmem_limit, budget = _vmem_limits()
    bh_tile, tq = _pick_tiles(BH, Lq, Lk, dk, dv, qkv_bytes, attn_bytes,
                              mask_mode, budget)
    grid = (BH // bh_tile, Lq // tq)

    in_specs = [
        pl.BlockSpec((bh_tile, tq, dk), lambda i, j: (i, j, 0)),
        pl.BlockSpec((bh_tile, Lk, dk), lambda i, j: (i, 0, 0)),
        pl.BlockSpec((bh_tile, Lk, dv), lambda i, j: (i, 0, 0)),
    ]
    inputs = [q, k, v]
    if mask is None:
        kernel = functools.partial(_sdpa_kernel_nomask, scale=scale)
    else:
        kernel = functools.partial(_sdpa_kernel_masked, scale=scale)
        if mask_mode == "shared":
            in_specs.append(pl.BlockSpec((1, tq, Lk), lambda i, j: (0, j, 0)))
        else:
            in_specs.append(
                pl.BlockSpec((bh_tile, tq, Lk), lambda i, j: (i, j, 0)))
        inputs.append(mask)

    mask_bytes = 0 if mask is None else int(mask.size)
    cost = pl.CostEstimate(
        flops=2 * BH * Lq * Lk * (dk + dv),
        transcendentals=BH * Lq * Lk,
        bytes_accessed=(q.size + k.size + v.size) * qkv_bytes + mask_bytes
        + BH * Lq * dv * 4 + BH * Lq * Lk * attn_bytes,
    )

    # TODO(synk): for very long Lk on v7x (64 MiB VMEM) add an inner
    # "arbitrary" Lk grid axis with flash-style running max/denominator, and a
    # lane-dense [tq, bh*dv] prob store for dv < 128.
    prob, attn = pl.pallas_call(
        kernel,
        out_shape=(
            jax.ShapeDtypeStruct((BH, Lq, dv), prob_dtype),
            jax.ShapeDtypeStruct((BH, Lq, Lk), attn_dtype),
        ),
        grid_spec=pltpu.PrefetchScalarGridSpec(
            num_scalar_prefetch=0,
            grid=grid,
            in_specs=in_specs,
            out_specs=[
                pl.BlockSpec((bh_tile, tq, dv), lambda i, j: (i, j, 0)),
                pl.BlockSpec((bh_tile, tq, Lk), lambda i, j: (i, j, 0)),
            ],
        ),
        compiler_params=pltpu.CompilerParams(
            dimension_semantics=("parallel", "parallel"),
            vmem_limit_bytes=vmem_limit,
        ),
        cost_estimate=cost,
    )(*inputs)

    return prob.reshape(B, H, Lq, dv), attn.reshape(B, H, Lq, Lk)


# -------------------------------- reference -------------------------------- #

def _reference(Q, K, V, attn_mask, d_k):
    # Mirrors the kernel's compute precision (bf16 MXU operands, f32
    # accumulation and softmax) so tolerances are meaningful.
    scale = 1.0 / float(np.sqrt(d_k))
    scores = jnp.einsum("bhqd,bhkd->bhqk",
                        Q.astype(jnp.bfloat16), K.astype(jnp.bfloat16),
                        preferred_element_type=jnp.float32) * scale
    if attn_mask is not None:
        scores = jnp.where(attn_mask, -jnp.inf, scores)
    attn = jax.nn.softmax(scores, axis=-1)
    prob = jnp.einsum("bhqk,bhkv->bhqv",
                      attn.astype(jnp.bfloat16), V.astype(jnp.bfloat16),
                      preferred_element_type=jnp.float32)
    return prob, attn


if __name__ == "__main__":
    B, H, Lq, Lk, d_k, d_v = 2, 2, 8, 8, 64, 32

    key = jax.random.PRNGKey(0)
    kq, kk, kv, km = jax.random.split(key, 4)
    Q = jax.random.normal(kq, (B, H, Lq, d_k), dtype=jnp.float32)
    K = jax.random.normal(kk, (B, H, Lk, d_k), dtype=jnp.float32)
    V = jax.random.normal(kv, (B, H, Lk, d_v), dtype=jnp.float32)
    # Random boolean mask; diagonal kept unmasked so no row is fully masked.
    rand_mask = jax.random.bernoulli(km, 0.25, (B, H, Lq, Lk))
    eye = jnp.eye(Lq, Lk, dtype=bool)[None, None]
    attn_mask = jnp.logical_and(rand_mask, jnp.logical_not(eye))

    # Masked path.
    prob, attn = scaled_dot_product_attention(Q, K, V, attn_mask, d_k=d_k)
    jax.block_until_ready((prob, attn))
    prob_ref, attn_ref = _reference(Q, K, V, attn_mask, d_k)
    assert prob.shape == (B, H, Lq, d_v) and attn.shape == (B, H, Lq, Lk)
    np.testing.assert_allclose(np.asarray(prob.astype(jnp.float32)),
                               np.asarray(prob_ref.astype(jnp.float32)),
                               rtol=2e-2, atol=2e-2)
    np.testing.assert_allclose(np.asarray(attn.astype(jnp.float32)),
                               np.asarray(attn_ref.astype(jnp.float32)),
                               rtol=2e-2, atol=2e-2)

    # Unmasked path (specialized kernel with no mask operand / DMA stream).
    prob_u, attn_u = scaled_dot_product_attention(Q, K, V, None, d_k=d_k)
    jax.block_until_ready((prob_u, attn_u))
    prob_ref_u, attn_ref_u = _reference(Q, K, V, None, d_k)
    np.testing.assert_allclose(np.asarray(prob_u.astype(jnp.float32)),
                               np.asarray(prob_ref_u.astype(jnp.float32)),
                               rtol=2e-2, atol=2e-2)
    np.testing.assert_allclose(np.asarray(attn_u.astype(jnp.float32)),
                               np.asarray(attn_ref_u.astype(jnp.float32)),
                               rtol=2e-2, atol=2e-2)

    print("KERNEL_OK")
</pallas_src>

<mosaic_0001>
module attributes {stable_mosaic.version = 11 : i64} {
  func.func @_sdpa_kernel_masked(%arg0: i32, %arg1: i32, %arg2: memref<2x8x64xf32, #tpu.memory_space<vmem>>, %arg3: memref<2x8x64xf32, #tpu.memory_space<vmem>>, %arg4: memref<2x8x32xf32, #tpu.memory_space<vmem>>, %arg5: memref<2x8x8xi8, #tpu.memory_space<vmem>>, %arg6: memref<2x8x32xf32, #tpu.memory_space<vmem>>, %arg7: memref<2x8x8xbf16, #tpu.memory_space<vmem>>) attributes {dimension_semantics = [#tpu.dimension_semantics<parallel>, #tpu.dimension_semantics<parallel>], iteration_bounds = array<i64: 2, 1>, scalar_prefetch = 0 : i64, scratch_operands = 0 : i64, tpu.core_type = #tpu.core_type<tc>, window_params = [{transform_indices = @transform_0, window_bounds = array<i64: 2, 8, 64>}, {transform_indices = @transform_1, window_bounds = array<i64: 2, 8, 64>}, {transform_indices = @transform_2, window_bounds = array<i64: 2, 8, 32>}, {transform_indices = @transform_3, window_bounds = array<i64: 2, 8, 8>}, {transform_indices = @transform_4, window_bounds = array<i64: 2, 8, 32>}, {transform_indices = @transform_5, window_bounds = array<i64: 2, 8, 8>}]} {
    %c0 = arith.constant 0 : index
    %c0_0 = arith.constant 0 : index
    %c0_1 = arith.constant 0 : index
    %0 = vector.load %arg2[%c0, %c0_0, %c0_1] : memref<2x8x64xf32, #tpu.memory_space<vmem>>, vector<2x8x64xf32>
    %1 = arith.truncf %0 : vector<2x8x64xf32> to vector<2x8x64xbf16>
    %c0_2 = arith.constant 0 : index
    %c0_3 = arith.constant 0 : index
    %c0_4 = arith.constant 0 : index
    %2 = vector.load %arg3[%c0_2, %c0_3, %c0_4] : memref<2x8x64xf32, #tpu.memory_space<vmem>>, vector<2x8x64xf32>
    %3 = arith.truncf %2 : vector<2x8x64xf32> to vector<2x8x64xbf16>
    %c0_5 = arith.constant 0 : index
    %c0_6 = arith.constant 0 : index
    %c0_7 = arith.constant 0 : index
    %4 = vector.load %arg4[%c0_5, %c0_6, %c0_7] : memref<2x8x32xf32, #tpu.memory_space<vmem>>, vector<2x8x32xf32>
    %5 = arith.truncf %4 : vector<2x8x32xf32> to vector<2x8x32xbf16>
    %cst = arith.constant dense<0.000000e+00> : vector<2x8x8xf32>
    %6 = tpu.matmul %1, %3, %cst {dimension_numbers = #tpu.dot_dimension_numbers<[2], [2], [1], [1], [0, 0, 0, 1, 1, 1], [0], [0]>} : vector<2x8x64xbf16>, vector<2x8x64xbf16>, vector<2x8x8xf32> -> vector<2x8x8xf32>
    %cst_8 = arith.constant 1.250000e-01 : f32
    %7 = vector.broadcast %cst_8 : f32 to vector<2x8x8xf32>
    %8 = arith.mulf %6, %7 : vector<2x8x8xf32>
    %c0_9 = arith.constant 0 : index
    %c0_10 = arith.constant 0 : index
    %c0_11 = arith.constant 0 : index
    %9 = vector.load %arg5[%c0_9, %c0_10, %c0_11] : memref<2x8x8xi8, #tpu.memory_space<vmem>>, vector<2x8x8xi8>
    %c0_i8 = arith.constant 0 : i8
    %10 = vector.broadcast %c0_i8 : i8 to vector<2x8x8xi8>
    %11 = arith.cmpi ne, %9, %10 : vector<2x8x8xi8>
    %cst_12 = arith.constant -1.000000e+30 : f32
    %12 = vector.broadcast %cst_12 : f32 to vector<2x8x8xf32>
    %13 = arith.select %11, %12, %8 : vector<2x8x8xi1>, vector<2x8x8xf32>
    %cst_13 = arith.constant dense<0xFF800000> : vector<2x8xf32>
    %14 = vector.multi_reduction <maximumf>, %13, %cst_13 [2] : vector<2x8x8xf32> to vector<2x8xf32>
    %15 = vector.shape_cast %14 : vector<2x8xf32> to vector<2x8x1xf32>
    %16 = vector.broadcast %15 : vector<2x8x1xf32> to vector<2x8x8xf32>
    %17 = arith.subf %13, %16 : vector<2x8x8xf32>
    %18 = math.exp %17 : vector<2x8x8xf32>
    %cst_14 = arith.constant dense<0.000000e+00> : vector<2x8xf32>
    %19 = vector.multi_reduction <add>, %18, %cst_14 [2] : vector<2x8x8xf32> to vector<2x8xf32>
    %20 = vector.shape_cast %19 : vector<2x8xf32> to vector<2x8x1xf32>
    %21 = tpu.reciprocal %20 : vector<2x8x1xf32> -> vector<2x8x1xf32>
    %22 = vector.broadcast %21 : vector<2x8x1xf32> to vector<2x8x8xf32>
    %23 = arith.mulf %18, %22 : vector<2x8x8xf32>
    %24 = arith.truncf %23 : vector<2x8x8xf32> to vector<2x8x8xbf16>
    %cst_15 = arith.constant dense<0.000000e+00> : vector<2x8x32xf32>
    %25 = tpu.matmul %24, %5, %cst_15 {dimension_numbers = #tpu.dot_dimension_numbers<[2], [1], [1], [2], [0, 0, 0, 1, 1, 2], [0], [0]>} : vector<2x8x8xbf16>, vector<2x8x32xbf16>, vector<2x8x32xf32> -> vector<2x8x32xf32>
    %26 = arith.truncf %23 : vector<2x8x8xf32> to vector<2x8x8xbf16>
    %c0_16 = arith.constant 0 : index
    %c0_17 = arith.constant 0 : index
    %c0_18 = arith.constant 0 : index
    %27 = vector.load %arg7[%c0_16, %c0_17, %c0_18] : memref<2x8x8xbf16, #tpu.memory_space<vmem>>, vector<2x8x8xbf16>
    tpu.vector_store %arg7[%c0_16, %c0_17, %c0_18], %26 {strides = array<i32>} : memref<2x8x8xbf16, #tpu.memory_space<vmem>>, vector<2x8x8xbf16>,
    %c0_19 = arith.constant 0 : index
    %c0_20 = arith.constant 0 : index
    %c0_21 = arith.constant 0 : index
    %28 = vector.load %arg6[%c0_19, %c0_20, %c0_21] : memref<2x8x32xf32, #tpu.memory_space<vmem>>, vector<2x8x32xf32>
    tpu.vector_store %arg6[%c0_19, %c0_20, %c0_21], %25 {strides = array<i32>} : memref<2x8x32xf32, #tpu.memory_space<vmem>>, vector<2x8x32xf32>,
    return
  }
  func.func @transform_0(%arg0: i32, %arg1: i32) -> (i32, i32, i32) {
    %c0_i32 = arith.constant 0 : i32
    %c0_i32_0 = arith.constant 0 : i32
    return %arg0, %arg1, %c0_i32 : i32, i32, i32
  }
  func.func @transform_1(%arg0: i32, %arg1: i32) -> (i32, i32, i32) {
    %c0_i32 = arith.constant 0 : i32
    %c0_i32_0 = arith.constant 0 : i32
    %c0_i32_1 = arith.constant 0 : i32
    return %arg0, %c0_i32, %c0_i32_0 : i32, i32, i32
  }
  func.func @transform_2(%arg0: i32, %arg1: i32) -> (i32, i32, i32) {
    %c0_i32 = arith.constant 0 : i32
    %c0_i32_0 = arith.constant 0 : i32
    %c0_i32_1 = arith.constant 0 : i32
    return %arg0, %c0_i32, %c0_i32_0 : i32, i32, i32
  }
  func.func @transform_3(%arg0: i32, %arg1: i32) -> (i32, i32, i32) {
    %c0_i32 = arith.constant 0 : i32
    %c0_i32_0 = arith.constant 0 : i32
    return %arg0, %arg1, %c0_i32 : i32, i32, i32
  }
  func.func @transform_4(%arg0: i32, %arg1: i32) -> (i32, i32, i32) {
    %c0_i32 = arith.constant 0 : i32
    %c0_i32_0 = arith.constant 0 : i32
    return %arg0, %arg1, %c0_i32 : i32, i32, i32
  }
  func.func @transform_5(%arg0: i32, %arg1: i32) -> (i32, i32, i32) {
    %c0_i32 = arith.constant 0 : i32
    %c0_i32_0 = arith.constant 0 : i32
    return %arg0, %arg1, %c0_i32 : i32, i32, i32
  }
}

</mosaic_0001>

<llo_original>
// kernel: tpu_custom_call.1
$region0: #{tpu_custom_call.1}
  #allocation0 [shape = 'u32[]', space=smem, size = 0x4, offset = 0x4, fixed_abs, tag = 'smem constant byte address 0x4 - core index']
  #allocation1 [shape = 'u32[144,128]{1,0:T(1,128)}', space=vmem, size = 0x12000, scoped, tag = 'internal scratch']
  %s0 = inlined_call_operand.hbm [shape: f32[4,8,64], index: 0, kind: input, shape index: {}]
  %s1 = inlined_call_operand.hbm [shape: f32[4,8,64], index: 1, kind: input, shape index: {}]
  %s2 = inlined_call_operand.hbm [shape: f32[4,8,32], index: 2, kind: input, shape index: {}]
  %s3 = inlined_call_operand.vmem [shape: s8[4,8,8], index: 3, kind: input, shape index: {}]
  %s4 = inlined_call_operand.hbm [shape: f32[4,8,32], index: 4, kind: output, shape index: {0}]
  %s5 = inlined_call_operand.hbm [shape: bf16[4,8,8], index: 5, kind: output, shape index: {1}]
  %6 = xla_tuple %s4, %s5
  %s7 = sld [smem:[#allocation0]]
  $region69: #{tpu_custom_call.1} parent=0
    _
  %s9 = ssub.s32 1, %s7
  %s10 = scalar_select 0, %s9, %s7
  $region1: #{tpu_custom_call.1} parent=0
    #allocation2 [shape = 'u8[16384]{0}', space=vmem, size = 0x4000, scoped, tag = 'input window, operand 0']
    #allocation3 [shape = 's32[2]{0}', space=sflag, size = 0x8, scoped, tag = 'scoped memory for tpu_custom_call.1']
    #allocation4 [shape = 's32[2]{0}', space=sflag, size = 0x8, scoped, tag = 'scoped memory for tpu_custom_call.1']
    #allocation5 [shape = 'u8[16384]{0}', space=vmem, size = 0x4000, scoped, tag = 'input window, operand 1']
    #allocation6 [shape = 's32[2]{0}', space=sflag, size = 0x8, scoped, tag = 'scoped memory for tpu_custom_call.1']
    #allocation7 [shape = 'u8[16384]{0}', space=vmem, size = 0x4000, scoped, tag = 'input window, operand 2']
    #allocation8 [shape = 'u8[16384]{0}', space=vmem, size = 0x4000, scoped, tag = 'output window, operand 0']
    #allocation9 [shape = 'u8[8192]{0}', space=vmem, size = 0x2000, scoped, tag = 'output window, operand 1']
    #allocation10 [shape = 's32[2]{0}', space=sflag, size = 0x8, scoped, tag = 'scoped memory for tpu_custom_call.1']
    %11 = vsyncpa [#allocation3], 0
    %s12 = scalar_lea.sflag [#allocation3], 1
    %13 = vsyncpa %s12, 0
    %14 = vsyncpa [#allocation6], 0
    %s15 = scalar_lea.sflag [#allocation6], 1
    %16 = vsyncpa %s15, 0
    %17 = vsyncpa [#allocation4], 0
    %s18 = scalar_lea.sflag [#allocation4], 1
    %19 = vsyncpa %s18, 0
    %20 = vsyncpa [#allocation10], 0
    %s21 = scalar_lea.sflag [#allocation10], 1
    %22 = vsyncpa %s21, 0
    loop: start=0, step=1, limit=4
    $region2: #{tpu_custom_call.1} parent=1 // loop_pre_header
      _
    $region3: #{tpu_custom_call.1} parent=1 // loop_header
      %s24 = sphi 0, %s28
      %p25 = scmp.ge.s32.totalorder %s24, 4
      %s31 = sphi 0, %s43
      %s32 = sphi 0, %s39
      %s33 = sphi 0, %s31
      %s34 = sphi 0, %s32
      %s35 = sphi 0, %s33
      %s36 = sphi 0, %s34
      %s48 = sphi 0, %s50
      %s51 = sphi 0, %s48
      %s52 = sphi 0, %s51
      %s68 = sphi 0, %s52
      %s74 = sphi 0, %s76
      %s77 = sphi 0, %s74
      %s78 = sphi 0, %s77
      %s94 = sphi 0, %s78
      %s100 = sphi 0, %s102
      %s103 = sphi 0, %s100
      %s104 = sphi 0, %s103
      %s120 = sphi 0, %s104
      %s128 = sphi 0, %s130
      %s131 = sphi 0, %s128
      %s132 = sphi 0, %s131
      %s148 = sphi 0, %s132
      %s156 = sphi 0, %s158
      %s159 = sphi 0, %s156
      %s160 = sphi 0, %s159
      %s176 = sphi 0, %s160
      %s184 = sphi 0, %s186
      %s187 = sphi 0, %s184
      %s188 = sphi 0, %s187
      %s204 = sphi 0, %s188
    $region4: #{tpu_custom_call.1} parent=1 // loop_header_branch
      %27 = sbr.rel (%p25) target = $region8
    $region5: #{tpu_custom_call.1} parent=1 // loop_body
      %s29 = ssub.s32 %s24, 1
      %s30 = ssub.s32 %s24, 2
      %s37 = sadd.s32 1, %s32
      %p38 = scmp.ge.s32.totalorder %s37, 1
      %s39 = scalar_select %p38, 0, %s37
      %s40 = sadd.s32 1, %s31
      %s41 = scalar_select %p38, %s40, %s31
      %p42 = scmp.ge.s32.totalorder %s41, 2
      %s43 = scalar_select %p42, 0, %s41
      %s44 = ssub.s32 %s31, %s43
      %s45 = ssub.s32 %s32, %s39
      %s46 = sor.u32 %s44, %s45
      %p47 = scmp.eq.s32.totalorder %s46, 0
      %s49 = sadd.s32 %s48, 1
      %s50 = scalar_select %p47, %s48, %s49
      %p53 = pneg %p47
      %p54 = scmp.eq.s32.totalorder %s24, 1
      %p55 = por %p53, %p54
      %p56 = scmp.ne.s32.totalorder %s48, %s51
      %p57 = scmp.eq.s32.totalorder %s24, 0
      %p58 = por %p56, %p57
      %p59 = scmp.ne.s32.totalorder %s48, %s51
      %p60 = scmp.eq.s32.totalorder %s29, 1
      %p61 = por %p59, %p60
      %p62 = scmp.ne.s32.totalorder %s51, %s52
      %p63 = scmp.eq.s32.totalorder %s29, 0
      %p64 = por %p62, %p63
      %p65 = scmp.ne.s32.totalorder %s51, %s52
      %p66 = scmp.eq.s32.totalorder %s30, 1
      %p67 = por %p65, %p66
      %p69 = scmp.ne.s32.totalorder %s52, %s68
      %p70 = scmp.eq.s32.totalorder %s30, 0
      %p71 = por %p69, %p70
      %s72 = ssub.s32 %s31, %s43
      %p73 = scmp.eq.s32.totalorder %s72, 0
      %s75 = sadd.s32 %s74, 1
      %s76 = scalar_select %p73, %s74, %s75
      %p79 = pneg %p73
      %p80 = scmp.eq.s32.totalorder %s24, 1
      %p81 = por %p79, %p80
      %p82 = scmp.ne.s32.totalorder %s74, %s77
      %p83 = scmp.eq.s32.totalorder %s24, 0
      %p84 = por %p82, %p83
      %p85 = scmp.ne.s32.totalorder %s74, %s77
      %p86 = scmp.eq.s32.totalorder %s29, 1
      %p87 = por %p85, %p86
      %p88 = scmp.ne.s32.totalorder %s77, %s78
      %p89 = scmp.eq.s32.totalorder %s29, 0
      %p90 = por %p88, %p89
      %p91 = scmp.ne.s32.totalorder %s77, %s78
      %p92 = scmp.eq.s32.totalorder %s30, 1
      %p93 = por %p91, %p92
      %p95 = scmp.ne.s32.totalorder %s78, %s94
      %p96 = scmp.eq.s32.totalorder %s30, 0
      %p97 = por %p95, %p96
      %s98 = ssub.s32 %s31, %s43
      %p99 = scmp.eq.s32.totalorder %s98, 0
      %s101 = sadd.s32 %s100, 1
      %s102 = scalar_select %p99, %s100, %s101
      %p105 = pneg %p99
      %p106 = scmp.eq.s32.totalorder %s24, 1
      %p107 = por %p105, %p106
      %p108 = scmp.ne.s32.totalorder %s100, %s103
      %p109 = scmp.eq.s32.totalorder %s24, 0
      %p110 = por %p108, %p109
      %p111 = scmp.ne.s32.totalorder %s100, %s103
      %p112 = scmp.eq.s32.totalorder %s29, 1
      %p113 = por %p111, %p112
      %p114 = scmp.ne.s32.totalorder %s103, %s104
      %p115 = scmp.eq.s32.totalorder %s29, 0
      %p116 = por %p114, %p115
      %p117 = scmp.ne.s32.totalorder %s103, %s104
      %p118 = scmp.eq.s32.totalorder %s30, 1
      %p119 = por %p117, %p118
      %p121 = scmp.ne.s32.totalorder %s104, %s120
      %p122 = scmp.eq.s32.totalorder %s30, 0
      %p123 = por %p121, %p122
      %s124 = ssub.s32 %s31, %s43
      %s125 = ssub.s32 %s32, %s39
      %s126 = sor.u32 %s124, %s125
      %p127 = scmp.eq.s32.totalorder %s126, 0
      %s129 = sadd.s32 %s128, 1
      %s130 = scalar_select %p127, %s128, %s129
      %p133 = pneg %p127
      %p134 = scmp.eq.s32.totalorder %s24, 1
      %p135 = por %p133, %p134
      %p136 = scmp.ne.s32.totalorder %s128, %s131
      %p137 = scmp.eq.s32.totalorder %s24, 0
      %p138 = por %p136, %p137
      %p139 = scmp.ne.s32.totalorder %s128, %s131
      %p140 = scmp.eq.s32.totalorder %s29, 1
      %p141 = por %p139, %p140
      %p142 = scmp.ne.s32.totalorder %s131, %s132
      %p143 = scmp.eq.s32.totalorder %s29, 0
      %p144 = por %p142, %p143
      %p145 = scmp.ne.s32.totalorder %s131, %s132
      %p146 = scmp.eq.s32.totalorder %s30, 1
      %p147 = por %p145, %p146
      %p149 = scmp.ne.s32.totalorder %s132, %s148
      %p150 = scmp.eq.s32.totalorder %s30, 0
      %p151 = por %p149, %p150
      %s152 = ssub.s32 %s31, %s43
      %s153 = ssub.s32 %s32, %s39
      %s154 = sor.u32 %s152, %s153
      %p155 = scmp.eq.s32.totalorder %s154, 0
      %s157 = sadd.s32 %s156, 1
      %s158 = scalar_select %p155, %s156, %s157
      %p161 = pneg %p155
      %p162 = scmp.eq.s32.totalorder %s24, 1
      %p163 = por %p161, %p162
      %p164 = scmp.ne.s32.totalorder %s156, %s159
      %p165 = scmp.eq.s32.totalorder %s24, 0
      %p166 = por %p164, %p165
      %p167 = scmp.ne.s32.totalorder %s156, %s159
      %p168 = scmp.eq.s32.totalorder %s29, 1
      %p169 = por %p167, %p168
      %p170 = scmp.ne.s32.totalorder %s159, %s160
      %p171 = scmp.eq.s32.totalorder %s29, 0
      %p172 = por %p170, %p171
      %p173 = scmp.ne.s32.totalorder %s159, %s160
      %p174 = scmp.eq.s32.totalorder %s30, 1
      %p175 = por %p173, %p174
      %p177 = scmp.ne.s32.totalorder %s160, %s176
      %p178 = scmp.eq.s32.totalorder %s30, 0
      %p179 = por %p177, %p178
      %s180 = ssub.s32 %s31, %s43
      %s181 = ssub.s32 %s32, %s39
      %s182 = sor.u32 %s180, %s181
      %p183 = scmp.eq.s32.totalorder %s182, 0
      %s185 = sadd.s32 %s184, 1
      %s186 = scalar_select %p183, %s184, %s185
      %p189 = pneg %p183
      %p190 = scmp.eq.s32.totalorder %s24, 1
      %p191 = por %p189, %p190
      %p192 = scmp.ne.s32.totalorder %s184, %s187
      %p193 = scmp.eq.s32.totalorder %s24, 0
      %p194 = por %p192, %p193
      %p195 = scmp.ne.s32.totalorder %s184, %s187
      %p196 = scmp.eq.s32.totalorder %s29, 1
      %p197 = por %p195, %p196
      %p198 = scmp.ne.s32.totalorder %s187, %s188
      %p199 = scmp.eq.s32.totalorder %s29, 0
      %p200 = por %p198, %p199
      %p201 = scmp.ne.s32.totalorder %s187, %s188
      %p202 = scmp.eq.s32.totalorder %s30, 1
      %p203 = por %p201, %p202
      %p205 = scmp.ne.s32.totalorder %s188, %s204
      %p206 = scmp.eq.s32.totalorder %s30, 0
      %p207 = por %p205, %p206
      %p208 = scmp.le.s32.totalorder 1, %s24
      %p209 = scmp.lt.s32.totalorder %s24, 3
      %p210 = pnand %p208, %p209
      %p211 = pneg %p210
      // Predicated region
      $region9: #{tpu_custom_call.1} parent=5 // pred_check
        _
      $region10: #{tpu_custom_call.1} parent=5 // pred_check_branch
        %213 = sbr.rel (%p210) target = $region12
      $region11: #{tpu_custom_call.1} parent=5 // pred_region
        %s214 = ssub.s32 %s24, 1
      $region12: #{tpu_custom_call.1} parent=5 // pred_fallthru
        _
      %p215 = scmp.lt.s32.totalorder %s24, 2
      // Predicated region
      $region13: #{tpu_custom_call.1} parent=5 // pred_check
        %p216 = pneg %p215
      $region14: #{tpu_custom_call.1} parent=5 // pred_check_branch
        %218 = sbr.rel (%p216) target = $region16
      $region15: #{tpu_custom_call.1} parent=5 // pred_region
        // Predicated region
        $region17: #{tpu_custom_call.1} parent=15 // pred_check
          %p219 = pneg %p58
        $region18: #{tpu_custom_call.1} parent=15 // pred_check_branch
          %221 = sbr.rel (%p219) target = $region20
        $region19: #{tpu_custom_call.1} parent=15 // pred_region
          %s222 = sand.u32 %s48, 1
          %s223 = scalar_lea.sflag [#allocation3], %s222
          %s224 = sand.u32 %s48, 1
          %s225 = smul.addr %s224, 16
          %s226 = scalar_lea.vmem [#allocation2], %s225
          %s227 = smul.u32 2, %s31
          %s229 = ssub.s32 256, 256
          %230 = vsyncadd %s223, %s229
          %s231 = sadd.s32 %s32, %s227
          %s232 = smul.addr %s231, 128
          %s233 = scalar_lea.hbm %s0, %s232
          %s234 = sshll.u32 %s226, 4
          %s235 = int_to_ptr.vmem [resolvable:$true] %s234
          %240 = dma.hbm_to_vmem [thread:$0]  %s233, 256, %s235, %s223, 128, 128, 8
        $region20: #{tpu_custom_call.1} parent=15 // pred_fallthru
          _
        // Predicated region
        $region21: #{tpu_custom_call.1} parent=15 // pred_check
          %p241 = pneg %p84
        $region22: #{tpu_custom_call.1} parent=15 // pred_check_branch
          %243 = sbr.rel (%p241) target = $region24
        $region23: #{tpu_custom_call.1} parent=15 // pred_region
          %s244 = sand.u32 %s24, 1
          %s245 = scalar_lea.sflag [#allocation6], %s244
          %s246 = sand.u32 %s74, 1
          %s247 = smul.addr %s246, 16
          %s248 = scalar_lea.vmem [#allocation5], %s247
          %s249 = smul.u32 2, %s31
          %s251 = ssub.s32 256, 256
          %252 = vsyncadd %s245, %s251
          %s253 = smul.addr %s249, 128
          %s254 = scalar_lea.hbm %s1, %s253
          %s255 = sshll.u32 %s248, 4
          %s256 = int_to_ptr.vmem [resolvable:$true] %s255
          %261 = dma.hbm_to_vmem [thread:$0]  %s254, 256, %s256, %s245, 128, 128, 8
        $region24: #{tpu_custom_call.1} parent=15 // pred_fallthru
          _
        // Predicated region
        $region25: #{tpu_custom_call.1} parent=15 // pred_check
          %p262 = pneg %p110
        $region26: #{tpu_custom_call.1} parent=15 // pred_check_branch
          %264 = sbr.rel (%p262) target = $region28
        $region27: #{tpu_custom_call.1} parent=15 // pred_region
          %s265 = sand.u32 %s24, 1
          %s266 = scalar_lea.sflag [#allocation6], %s265
          %s267 = sand.u32 %s100, 1
          %s268 = smul.addr %s267, 16
          %s269 = scalar_lea.vmem [#allocation7], %s268
          %s270 = smul.u32 2, %s31
          %s272 = ssub.s32 256, 256
          %273 = vsyncadd %s266, %s272
          %s274 = smul.addr %s270, 128
          %s275 = scalar_lea.hbm %s2, %s274
          %s276 = sshll.u32 %s269, 4
          %s277 = int_to_ptr.vmem [resolvable:$true] %s276
          %282 = dma.hbm_to_vmem [thread:$0]  %s275, 256, %s277, %s266, 128, 128, 8
        $region28: #{tpu_custom_call.1} parent=15 // pred_fallthru
          _
        // Predicated region
        $region29: #{tpu_custom_call.1} parent=15 // pred_check
          %p283 = pneg %p138
        $region30: #{tpu_custom_call.1} parent=15 // pred_check_branch
          %285 = sbr.rel (%p283) target = $region32
        $region31: #{tpu_custom_call.1} parent=15 // pred_region
          %s286 = smul.u32 2, %s31
          %p287 = scmp.lt.s32.totalorder %s286, 3
          %s288 = scalar_select %p287, %s286, 3
          %p289 = scmp.lt.s32.totalorder %s32, 0
          %s290 = scalar_select %p289, %s32, 0
          %s291 = sadd.s32 %s290, %s288
          %s292 = smul.addr %s291, 2
          %s293 = scalar_lea.vmem %s3, %s292
          %s294 = smul.u32 2, %s31
        $region32: #{tpu_custom_call.1} parent=15 // pred_fallthru
          _
      $region16: #{tpu_custom_call.1} parent=5 // pred_fallthru
        _
      %p295 = scmp.le.s32.totalorder 1, %s24
      %p296 = scmp.lt.s32.totalorder %s24, 3
      %p297 = pnand %p295, %p296
      %p298 = pneg %p297
      // Predicated region
      $region33: #{tpu_custom_call.1} parent=5 // pred_check
        _
      $region34: #{tpu_custom_call.1} parent=5 // pred_check_branch
        %300 = sbr.rel (%p297) target = $region36
      $region35: #{tpu_custom_call.1} parent=5 // pred_region
        %s301 = ssub.s32 %s24, 1
        %s302 = sand.u32 %s51, 1
        %s303 = scalar_lea.sflag [#allocation3], %s302
        %s304 = sand.u32 %s51, 1
        %s305 = smul.addr %s304, 16
        %s306 = scalar_lea.vmem [#allocation2], %s305
        // Predicated region
        $region37: #{tpu_custom_call.1} parent=35 // pred_check
          %p307 = pneg %p64
        $region38: #{tpu_custom_call.1} parent=35 // pred_check_branch
          %309 = sbr.rel (%p307) target = $region40
        $region39: #{tpu_custom_call.1} parent=35 // pred_region
          %310 = dma.done %s303, 256
        $region40: #{tpu_custom_call.1} parent=35 // pred_fallthru
          _
        %s311 = sand.u32 %s29, 1
        %s312 = scalar_lea.sflag [#allocation6], %s311
        %s313 = sand.u32 %s77, 1
        %s314 = smul.addr %s313, 16
        %s315 = scalar_lea.vmem [#allocation5], %s314
        // Predicated region
        $region41: #{tpu_custom_call.1} parent=35 // pred_check
          %p316 = pneg %p90
        $region42: #{tpu_custom_call.1} parent=35 // pred_check_branch
          %318 = sbr.rel (%p316) target = $region44
        $region43: #{tpu_custom_call.1} parent=35 // pred_region
          %319 = dma.done %s312, 256
        $region44: #{tpu_custom_call.1} parent=35 // pred_fallthru
          _
        %s320 = sand.u32 %s29, 1
        %s321 = scalar_lea.sflag [#allocation6], %s320
        %s322 = sand.u32 %s103, 1
        %s323 = smul.addr %s322, 16
        %s324 = scalar_lea.vmem [#allocation7], %s323
        // Predicated region
        $region45: #{tpu_custom_call.1} parent=35 // pred_check
          %p325 = pneg %p116
        $region46: #{tpu_custom_call.1} parent=35 // pred_check_branch
          %327 = sbr.rel (%p325) target = $region48
        $region47: #{tpu_custom_call.1} parent=35 // pred_region
          %328 = dma.done %s321, 256
        $region48: #{tpu_custom_call.1} parent=35 // pred_fallthru
          _
        %s329 = sand.u32 %s51, 1
        %s330 = scalar_lea.sflag [#allocation3], %s329
        %s331 = sand.u32 %s51, 1
        %s332 = smul.addr %s331, 16
        %s333 = scalar_lea.vmem [#allocation2], %s332
        %p334 = pneg %p64
        %p335 = pneg %p61
        %s336 = sand.u32 %s29, 1
        %s337 = scalar_lea.sflag [#allocation6], %s336
        %s338 = sand.u32 %s77, 1
        %s339 = smul.addr %s338, 16
        %s340 = scalar_lea.vmem [#allocation5], %s339
        %p341 = pneg %p90
        %p342 = pneg %p87
        %s343 = sand.u32 %s29, 1
        %s344 = scalar_lea.sflag [#allocation6], %s343
        %s345 = sand.u32 %s103, 1
        %s346 = smul.addr %s345, 16
        %s347 = scalar_lea.vmem [#allocation7], %s346
        %p348 = pneg %p116
        %p349 = pneg %p113
        %s350 = smul.u32 2, %s33
        %p351 = scmp.lt.s32.totalorder %s350, 3
        %s352 = scalar_select %p351, %s350, 3
        %p353 = scmp.lt.s32.totalorder %s34, 0
        %s354 = scalar_select %p353, %s34, 0
        %s355 = sadd.s32 %s354, %s352
        %s356 = smul.addr %s355, 2
        %s357 = scalar_lea.vmem %s3, %s356
        %p358 = pneg %p144
        %p359 = pneg %p141
        %p360 = pneg %p172
        %p361 = pneg %p169
        %s362 = sand.u32 %s159, 1
        %s363 = scalar_lea.sflag [#allocation4], %s362
        %s364 = sand.u32 %s159, 1
        %s365 = smul.addr %s364, 16
        %s366 = scalar_lea.vmem [#allocation8], %s365
        %p367 = pneg %p200
        %p368 = pneg %p197
        %s369 = sand.u32 %s187, 1
        %s370 = scalar_lea.sflag [#allocation10], %s369
        %s371 = sand.u32 %s187, 1
        %s372 = smul.addr %s371, 8
        %s373 = scalar_lea.vmem [#allocation9], %s372
        %s374 = smul.u32 2, %s33
        %s375 = smul.u32 2, %s33
        %s376 = smul.u32 2, %s33
        %s377 = smul.u32 2, %s33
        %p378 = scmp.lt.s32.totalorder %s377, 3
        %s379 = scalar_select %p378, %s377, 3
        %p380 = scmp.lt.s32.totalorder %s34, 0
        %s381 = scalar_select %p380, %s34, 0
        %s382 = sadd.s32 %s381, %s379
        %s383 = smul.addr %s382, 2
        %s384 = scalar_lea.vmem %s3, %s383
        %s385 = smul.u32 2, %s33
        %s386 = smul.u32 2, %s33
        %s387 = smul.u32 2, %s33
        %v391 = vld [vmem:[%s306] sm:$0xff]
        %v392 = vld [vmem:[%s306 + $0x8] sm:$0xff]
        %v393 = vpack.c.bf16 %v391, %v391
        %v394 = vpack.c.bf16 %v392, %v392
        %v395 = vld [vmem:[%s315] sm:$0xff]
        %v396 = vld [vmem:[%s315 + $0x8] sm:$0xff]
        %v397 = vpack.c.bf16 %v395, %v395
        %v398 = vpack.c.bf16 %v396, %v396
        %v399 = vld [vmem:[%s324] sm:$0xff]
        %v400 = vld [vmem:[%s324 + $0x8] sm:$0xff]
        %v401 = vpack.c.bf16 %v399, %v399
        %v402 = vpack.c.bf16 %v400, %v400
        %vm403 = vcmask 523264
        %v405 = vsel %vm403, %v393, 0
        %v408 = vsel %vm403, %v397, 0
        %410 = vmatprep.subr.bf16.mxu0 0
        %411 = vmatpush1.bf16.xpose.msra.mxu0 %v408
        %412 = vmatprep.subr.bf16.mxu0 0
        %413 = vmatpush1.bf16.xpose.msra.mxu0 0
        %414 = vmatprep.subr.bf16.mxu0 0
        %415 = vmatpush1.bf16.xpose.msra.mxu0 0
        %416 = vmatprep.subr.bf16.mxu0 0
        %417 = vmatpush1.bf16.xpose.msra.mxu0 0
        %418 = vmatprep.subr.bf16.mxu0 0
        %419 = vmatpush1.bf16.xpose.msra.mxu0 0
        %420 = vmatprep.subr.bf16.mxu0 0
        %421 = vmatpush1.bf16.xpose.msra.mxu0 0
        %422 = vmatprep.subr.bf16.mxu0 0
        %423 = vmatpush1.bf16.xpose.msra.mxu0 0
        %424 = vmatprep.subr.bf16.mxu0 0
        %425 = vmatpush1.bf16.xpose.msra.mxu0 0
        %426 = vmatprep.subr.bf16.mxu0 0
        %427 = vmatpush1.bf16.xpose.msra.mxu0 0
        %428 = vmatprep.subr.bf16.mxu0 0
        %429 = vmatpush1.bf16.xpose.msra.mxu0 0
        %430 = vmatprep.subr.bf16.mxu0 0
        %431 = vmatpush1.bf16.xpose.msra.mxu0 0
        %432 = vmatprep.subr.bf16.mxu0 0
        %433 = vmatpush1.bf16.xpose.msra.mxu0 0
        %434 = vmatprep.subr.bf16.mxu0 0
        %435 = vmatpush1.bf16.xpose.msra.mxu0 0
        %436 = vmatprep.subr.bf16.mxu0 0
        %437 = vmatpush1.bf16.xpose.msra.mxu0 0
        %438 = vmatprep.subr.bf16.mxu0 0
        %439 = vmatpush1.bf16.xpose.msra.mxu0 0
        %440 = vmatprep.subr.bf16.mxu0 0
        %441 = vmatpush1.bf16.xpose.msra.mxu0 0
        %442 = vmatprep.mubr.bf16.mxu0 0
        %443 = vmatmul.mubr.bf16.gmra.mrb[0].mxu0 %v405
        %v444 = vpop.f32.mrb[0].mxu0
        %v445 = vadd.f32 0.0, %v444
        %v446 = vpop.f32.mrb[0].mxu0
        %v447 = vpop.f32.mrb[0].mxu0
        %v448 = vpop.f32.mrb[0].mxu0
        %449 = vdwg.mxu0
        %v451 = vsel %vm403, %v394, 0
        %v454 = vsel %vm403, %v398, 0
        %456 = vmatprep.subr.bf16.mxu0 0
        %457 = vmatpush1.bf16.xpose.msra.mxu0 %v454
        %458 = vmatprep.subr.bf16.mxu0 0
        %459 = vmatpush1.bf16.xpose.msra.mxu0 0
        %460 = vmatprep.subr.bf16.mxu0 0
        %461 = vmatpush1.bf16.xpose.msra.mxu0 0
        %462 = vmatprep.subr.bf16.mxu0 0
        %463 = vmatpush1.bf16.xpose.msra.mxu0 0
        %464 = vmatprep.subr.bf16.mxu0 0
        %465 = vmatpush1.bf16.xpose.msra.mxu0 0
        %466 = vmatprep.subr.bf16.mxu0 0
        %467 = vmatpush1.bf16.xpose.msra.mxu0 0
        %468 = vmatprep.subr.bf16.mxu0 0
        %469 = vmatpush1.bf16.xpose.msra.mxu0 0
        %470 = vmatprep.subr.bf16.mxu0 0
        %471 = vmatpush1.bf16.xpose.msra.mxu0 0
        %472 = vmatprep.subr.bf16.mxu0 0
        %473 = vmatpush1.bf16.xpose.msra.mxu0 0
        %474 = vmatprep.subr.bf16.mxu0 0
        %475 = vmatpush1.bf16.xpose.msra.mxu0 0
        %476 = vmatprep.subr.bf16.mxu0 0
        %477 = vmatpush1.bf16.xpose.msra.mxu0 0
        %478 = vmatprep.subr.bf16.mxu0 0
        %479 = vmatpush1.bf16.xpose.msra.mxu0 0
        %480 = vmatprep.subr.bf16.mxu0 0
        %481 = vmatpush1.bf16.xpose.msra.mxu0 0
        %482 = vmatprep.subr.bf16.mxu0 0
        %483 = vmatpush1.bf16.xpose.msra.mxu0 0
        %484 = vmatprep.subr.bf16.mxu0 0
        %485 = vmatpush1.bf16.xpose.msra.mxu0 0
        %486 = vmatprep.subr.bf16.mxu0 0
        %487 = vmatpush1.bf16.xpose.msra.mxu0 0
        %488 = vmatprep.mubr.bf16.mxu0 0
        %489 = vmatmul.mubr.bf16.gmra.mrb[0].mxu0 %v451
        %v490 = vpop.f32.mrb[0].mxu0
        %v491 = vadd.f32 0.0, %v490
        %v492 = vpop.f32.mrb[0].mxu0
        %v493 = vpop.f32.mrb[0].mxu0
        %v494 = vpop.f32.mrb[0].mxu0
        %495 = vdwg.mxu0
        %v496 = vmul.f32 %v445, 0.125
        %v497 = vmul.f32 %v491, 0.125
        %v498 = vld [vmem:[%s384] sm:$0x3]
        %v499 = vld [vmem:[%s384 + $0x2] sm:$0x3]
        %vm500 = vnez %v498
        %vm501 = vnez %v499
        %v502 = vsel %vm500, 16843009, 0
        %v503 = vsel %vm501, 16843009, 0
        %v504 = vunpack.c.0.s8 %v502
        %v505 = vunpack.c.0.s8 %v503
        %vm506 = vcmp.ne.s32.totalorder %v504, 0
        %vm507 = vcmp.ne.s32.totalorder %v505, 0
        %v508 = vsel %vm506, -1e+30, %v496
        %v509 = vsel %vm507, -1e+30, %v497
        %vm510 = vcmask 64512
        %v511 = vsel %vm510, %v508, -inf
        %512 = vmax.xlane.f32.xlu0 %v511
        %v513 = vpop.xlane.xlu0 %512
        %v514 = vsel %vm510, %v509, -inf
        %515 = vmax.xlane.f32.xlu0 %v514
        %v516 = vpop.xlane.xlu0 %515
        %v517 = vsub.f32 %v508, %v513
        %v518 = vsub.f32 %v509, %v516
        %v519 = vmul.f32 %v517, 1.442695
        %v520 = vpow.pop %v519
        %v521 = vmul.f32 %v518, 1.442695
        %v522 = vpow.pop %v521
        %v523 = vsel %vm510, %v520, 0.0
        %524 = vadd.xlane.f32.xlu0 %v523
        %v525 = vpop.xlane.xlu0 %524
        %v526 = vsel %vm510, %v522, 0.0
        %527 = vadd.xlane.f32.xlu0 %v526
        %v528 = vpop.xlane.xlu0 %527
        %v529 = vrcp.pop %v525
        %v530 = vrcp.pop %v528
        %v531 = vmul.f32 %v520, %v529
        %v532 = vmul.f32 %v522, %v530
        %v533 = vpack.c.bf16 %v531, %v531
        %v534 = vpack.c.bf16 %v532, %v532
        %v536 = vsel %vm510, %v533, 0
        %vm538 = vcmask 1043456
        %v540 = vsel %vm538, %v401, 0
        %542 = vmatprep.subr.bf16.mxu0 0
        %543 = vmatpush1.bf16.msra.mxu0 %v540
        %544 = vmatprep.subr.bf16.mxu0 0
        %545 = vmatpush1.bf16.msra.mxu0 0
        %546 = vmatprep.subr.bf16.mxu0 0
        %547 = vmatpush1.bf16.msra.mxu0 0
        %548 = vmatprep.subr.bf16.mxu0 0
        %549 = vmatpush1.bf16.msra.mxu0 0
        %550 = vmatprep.subr.bf16.mxu0 0
        %551 = vmatpush1.bf16.msra.mxu0 0
        %552 = vmatprep.subr.bf16.mxu0 0
        %553 = vmatpush1.bf16.msra.mxu0 0
        %554 = vmatprep.subr.bf16.mxu0 0
        %555 = vmatpush1.bf16.msra.mxu0 0
        %556 = vmatprep.subr.bf16.mxu0 0
        %557 = vmatpush1.bf16.msra.mxu0 0
        %558 = vmatprep.subr.bf16.mxu0 0
        %559 = vmatpush1.bf16.msra.mxu0 0
        %560 = vmatprep.subr.bf16.mxu0 0
        %561 = vmatpush1.bf16.msra.mxu0 0
        %562 = vmatprep.subr.bf16.mxu0 0
        %563 = vmatpush1.bf16.msra.mxu0 0
        %564 = vmatprep.subr.bf16.mxu0 0
        %565 = vmatpush1.bf16.msra.mxu0 0
        %566 = vmatprep.subr.bf16.mxu0 0
        %567 = vmatpush1.bf16.msra.mxu0 0
        %568 = vmatprep.subr.bf16.mxu0 0
        %569 = vmatpush1.bf16.msra.mxu0 0
        %570 = vmatprep.subr.bf16.mxu0 0
        %571 = vmatpush1.bf16.msra.mxu0 0
        %572 = vmatprep.subr.bf16.mxu0 0
        %573 = vmatpush1.bf16.msra.mxu0 0
        %574 = vmatprep.mubr.bf16.mxu0 0
        %575 = vmatmul.mubr.bf16.gmra.mrb[0].mxu0 %v536
        %v576 = vpop.f32.mrb[0].mxu0
        %v577 = vadd.f32 0.0, %v576
        %v578 = vpop.f32.mrb[0].mxu0
        %v579 = vpop.f32.mrb[0].mxu0
        %v580 = vpop.f32.mrb[0].mxu0
        %581 = vdwg.mxu0
        %v583 = vsel %vm510, %v534, 0
        %v586 = vsel %vm538, %v402, 0
        %588 = vmatprep.subr.bf16.mxu0 0
        %589 = vmatpush1.bf16.msra.mxu0 %v586
        %590 = vmatprep.subr.bf16.mxu0 0
        %591 = vmatpush1.bf16.msra.mxu0 0
        %592 = vmatprep.subr.bf16.mxu0 0
        %593 = vmatpush1.bf16.msra.mxu0 0
        %594 = vmatprep.subr.bf16.mxu0 0
        %595 = vmatpush1.bf16.msra.mxu0 0
        %596 = vmatprep.subr.bf16.mxu0 0
        %597 = vmatpush1.bf16.msra.mxu0 0
        %598 = vmatprep.subr.bf16.mxu0 0
        %599 = vmatpush1.bf16.msra.mxu0 0
        %600 = vmatprep.subr.bf16.mxu0 0
        %601 = vmatpush1.bf16.msra.mxu0 0
        %602 = vmatprep.subr.bf16.mxu0 0
        %603 = vmatpush1.bf16.msra.mxu0 0
        %604 = vmatprep.subr.bf16.mxu0 0
        %605 = vmatpush1.bf16.msra.mxu0 0
        %606 = vmatprep.subr.bf16.mxu0 0
        %607 = vmatpush1.bf16.msra.mxu0 0
        %608 = vmatprep.subr.bf16.mxu0 0
        %609 = vmatpush1.bf16.msra.mxu0 0
        %610 = vmatprep.subr.bf16.mxu0 0
        %611 = vmatpush1.bf16.msra.mxu0 0
        %612 = vmatprep.subr.bf16.mxu0 0
        %613 = vmatpush1.bf16.msra.mxu0 0
        %614 = vmatprep.subr.bf16.mxu0 0
        %615 = vmatpush1.bf16.msra.mxu0 0
        %616 = vmatprep.subr.bf16.mxu0 0
        %617 = vmatpush1.bf16.msra.mxu0 0
        %618 = vmatprep.subr.bf16.mxu0 0
        %619 = vmatpush1.bf16.msra.mxu0 0
        %620 = vmatprep.mubr.bf16.mxu0 0
        %621 = vmatmul.mubr.bf16.gmra.mrb[0].mxu0 %v583
        %v622 = vpop.f32.mrb[0].mxu0
        %v623 = vadd.f32 0.0, %v622
        %v624 = vpop.f32.mrb[0].mxu0
        %v625 = vpop.f32.mrb[0].mxu0
        %v626 = vpop.f32.mrb[0].mxu0
        %627 = vdwg.mxu0
        %vm628 = vcmask 60416
        %629 = vst.msk [vmem:[%s373] sm:$0xf] %vm628, %v533
        %630 = vst.msk [vmem:[%s373 + $0x4] sm:$0xf] %vm628, %v534
        %vm631 = vcmask 261120
        %632 = vst.msk [vmem:[%s366] sm:$0xff] %vm631, %v577
        %633 = vst.msk [vmem:[%s366 + $0x8] sm:$0xff] %vm631, %v623
        %s634 = sand.u32 %s159, 1
        %s635 = scalar_lea.sflag [#allocation4], %s634
        %s636 = sand.u32 %s159, 1
        %s637 = smul.addr %s636, 16
        %s638 = scalar_lea.vmem [#allocation8], %s637
        %s639 = sand.u32 %s187, 1
        %s640 = scalar_lea.sflag [#allocation10], %s639
        %s641 = sand.u32 %s187, 1
        %s642 = smul.addr %s641, 8
        %s643 = scalar_lea.vmem [#allocation9], %s642
        // Predicated region
        $region49: #{tpu_custom_call.1} parent=35 // pred_check
          %p644 = pneg %p169
        $region50: #{tpu_custom_call.1} parent=35 // pred_check_branch
          %646 = sbr.rel (%p644) target = $region52
        $region51: #{tpu_custom_call.1} parent=35 // pred_region
          %s647 = smul.u32 2, %s33
          %s649 = ssub.s32 256, 256
          %650 = vsyncadd %s635, %s649
          %s651 = sadd.s32 %s34, %s647
          %s652 = smul.addr %s651, 128
          %s653 = scalar_lea.hbm %s4, %s652
          %s654 = sshll.u32 %s638, 4
          %s655 = int_to_ptr.vmem [resolvable:$true] %s654
          %660 = dma.vmem_to_hbm [thread:$0]  %s655, 256, %s653, %s635, 128, 128, 8
        $region52: #{tpu_custom_call.1} parent=35 // pred_fallthru
          _
        // Predicated region
        $region53: #{tpu_custom_call.1} parent=35 // pred_check
          %p661 = pneg %p197
        $region54: #{tpu_custom_call.1} parent=35 // pred_check_branch
          %663 = sbr.rel (%p661) target = $region56
        $region55: #{tpu_custom_call.1} parent=35 // pred_region
          %s664 = smul.u32 2, %s33
          %s666 = ssub.s32 128, 128
          %667 = vsyncadd %s640, %s666
          %s668 = sadd.s32 %s34, %s664
          %s669 = smul.addr %s668, 64
          %s670 = scalar_lea.hbm %s5, %s669
          %s671 = sshll.u32 %s643, 4
          %s672 = int_to_ptr.vmem [resolvable:$true] %s671
          %677 = dma.vmem_to_hbm [thread:$0]  %s672, 128, %s670, %s640, 64, 64, 4
        $region56: #{tpu_custom_call.1} parent=35 // pred_fallthru
          _
      $region36: #{tpu_custom_call.1} parent=5 // pred_fallthru
        _
      %p678 = scmp.le.s32.totalorder 2, %s24
      // Predicated region
      $region57: #{tpu_custom_call.1} parent=5 // pred_check
        %p679 = pneg %p678
      $region58: #{tpu_custom_call.1} parent=5 // pred_check_branch
        %681 = sbr.rel (%p679) target = $region60
      $region59: #{tpu_custom_call.1} parent=5 // pred_region
        %s682 = ssub.s32 %s24, 2
        // Predicated region
        $region61: #{tpu_custom_call.1} parent=59 // pred_check
          %p683 = pneg %p175
        $region62: #{tpu_custom_call.1} parent=59 // pred_check_branch
          %685 = sbr.rel (%p683) target = $region64
        $region63: #{tpu_custom_call.1} parent=59 // pred_region
          %s686 = sand.u32 %s160, 1
          %s687 = scalar_lea.sflag [#allocation4], %s686
          %s688 = sand.u32 %s160, 1
          %s689 = smul.addr %s688, 16
          %s690 = scalar_lea.vmem [#allocation8], %s689
          %691 = dma.done %s687, 256
        $region64: #{tpu_custom_call.1} parent=59 // pred_fallthru
          _
        // Predicated region
        $region65: #{tpu_custom_call.1} parent=59 // pred_check
          %p692 = pneg %p203
        $region66: #{tpu_custom_call.1} parent=59 // pred_check_branch
          %694 = sbr.rel (%p692) target = $region68
        $region67: #{tpu_custom_call.1} parent=59 // pred_region
          %s695 = sand.u32 %s188, 1
          %s696 = scalar_lea.sflag [#allocation10], %s695
          %s697 = sand.u32 %s188, 1
          %s698 = smul.addr %s697, 8
          %s699 = scalar_lea.vmem [#allocation9], %s698
          %700 = dma.done %s696, 128
        $region68: #{tpu_custom_call.1} parent=59 // pred_fallthru
          _
      $region60: #{tpu_custom_call.1} parent=5 // pred_fallthru
        _
    $region6: #{tpu_custom_call.1} parent=1 // loop_footer
      %s28 = sadd.s32 1, %s24
    $region7: #{tpu_custom_call.1} parent=1 // loop_footer_branch
      %23 = sbr.rel target = $region3
    $region8: #{tpu_custom_call.1} parent=1 // loop_exit
      _
    %701 = vsyncpa [#allocation3], 1
    %s702 = scalar_lea.sflag [#allocation3], 1
    %703 = vsyncpa %s702, 1
    %704 = vsyncpa [#allocation6], 1
    %s705 = scalar_lea.sflag [#allocation6], 1
    %706 = vsyncpa %s705, 1
    %707 = vsyncpa [#allocation4], 1
    %s708 = scalar_lea.sflag [#allocation4], 1
    %709 = vsyncpa %s708, 1
    %710 = vsyncpa [#allocation10], 1
    %s711 = scalar_lea.sflag [#allocation10], 1
    %712 = vsyncpa %s711, 1

</llo_original>
